<compile_context>
chip_gen: v6e
topology: v6e:2x2x1
jax: 0.10.0
libtpu: 0.0.40
codegen_flags: <defaults>
</compile_context>

<pallas_src>
import functools
import math

import jax
import jax.numpy as jnp
from jax.experimental import pallas as pl
from jax.experimental.pallas import tpu as pltpu


def _hard_cutoff_kernel(dist_ref, out_ref, *, cutoff: float):
    # dist_ref / out_ref: VMEM tiles of shape (TILE_R, LANES)
    d = dist_ref[...]
    # Compare in the input dtype (weakly-typed Python float keeps d's dtype),
    # then cast the boolean mask to float32 to match `.float()` in PyTorch.
    out_ref[...] = (d <= cutoff).astype(jnp.float32)


def _round_up(x: int, m: int) -> int:
    return ((x + m - 1) // m) * m


def hard_cutoff(distances: jax.Array, cutoff: float = 5.0) -> jax.Array:
    """Pallas implementation of HardCutoff.forward.

    Args:
        distances: float array of any shape (interatomic distances).
        cutoff: cutoff radius (static scalar, baked into the kernel).

    Returns:
        float32 array of the same shape: 1.0 where d <= cutoff else 0.0.
    """
    orig_shape = distances.shape
    total = math.prod(orig_shape)

    # Lane-dense layout: last dim is a large multiple of 128.
    LANES = 512
    # Row tile: up to 1024 rows per grid step (2 MiB f32 per buffer).
    MAX_TILE_R = 1024

    rows = _round_up(total, LANES) // LANES
    tile_r = min(MAX_TILE_R, rows)
    rows_padded = _round_up(rows, tile_r)
    padded_total = rows_padded * LANES

    flat = distances.reshape(-1)
    if padded_total != total:
        # Padded tail values are sliced off below, so their mask value is
        # irrelevant for correctness.
        flat = jnp.pad(flat, (0, padded_total - total))
    x2d = flat.reshape(rows_padded, LANES)

    grid = (rows_padded // tile_r,)

    out2d = pl.pallas_call(
        functools.partial(_hard_cutoff_kernel, cutoff=float(cutoff)),
        out_shape=jax.ShapeDtypeStruct((rows_padded, LANES), jnp.float32),
        grid_spec=pltpu.PrefetchScalarGridSpec(
            num_scalar_prefetch=0,
            grid=grid,
            in_specs=[pl.BlockSpec((tile_r, LANES), lambda i: (i, 0))],
            out_specs=pl.BlockSpec((tile_r, LANES), lambda i: (i, 0)),
        ),
        compiler_params=pltpu.CompilerParams(
            dimension_semantics=("parallel",),
        ),
    )(x2d)

    return out2d.reshape(-1)[:total].reshape(orig_shape)


if __name__ == "__main__":
    key = jax.random.PRNGKey(0)
    B, A, N = 2, 8, 16  # batch, atoms, neighbors (schnetpack convention)
    # distances in [0, 10) so both sides of the 5.0 cutoff are exercised
    distances = jax.random.uniform(
        key, (B, A, N), dtype=jnp.float32, minval=0.0, maxval=10.0
    )

    out = hard_cutoff(distances, cutoff=5.0)
    out = jax.block_until_ready(out)

    # reference check in plain JAX
    ref = (distances <= 5.0).astype(jnp.float32)
    assert out.shape == (B, A, N)
    assert out.dtype == jnp.float32
    assert bool(jnp.all(out == ref))

    print("KERNEL_OK")
</pallas_src>

<mosaic_0001>
module attributes {stable_mosaic.version = 11 : i64} {
  func.func @_hard_cutoff_kernel(%arg0: i32, %arg1: memref<1x512xf32, #tpu.memory_space<vmem>>, %arg2: memref<1x512xf32, #tpu.memory_space<vmem>>) attributes {dimension_semantics = [#tpu.dimension_semantics<parallel>], iteration_bounds = array<i64: 1>, scalar_prefetch = 0 : i64, scratch_operands = 0 : i64, tpu.core_type = #tpu.core_type<tc>, window_params = [{transform_indices = @transform_0, window_bounds = array<i64: 1, 512>}, {transform_indices = @transform_1, window_bounds = array<i64: 1, 512>}]} {
    %c0 = arith.constant 0 : index
    %c0_0 = arith.constant 0 : index
    %0 = vector.load %arg1[%c0, %c0_0] : memref<1x512xf32, #tpu.memory_space<vmem>>, vector<1x512xf32>
    %cst = arith.constant 5.000000e+00 : f32
    %1 = vector.broadcast %cst : f32 to vector<1x512xf32>
    %2 = arith.cmpf ole, %0, %1 : vector<1x512xf32>
    %3 = arith.extui %2 : vector<1x512xi1> to vector<1x512xi32>
    %4 = arith.sitofp %3 : vector<1x512xi32> to vector<1x512xf32>
    %c0_1 = arith.constant 0 : index
    %c0_2 = arith.constant 0 : index
    %5 = vector.load %arg2[%c0_1, %c0_2] : memref<1x512xf32, #tpu.memory_space<vmem>>, vector<1x512xf32>
    tpu.vector_store %arg2[%c0_1, %c0_2], %4 {strides = array<i32>} : memref<1x512xf32, #tpu.memory_space<vmem>>, vector<1x512xf32>,
    return
  }
  func.func @transform_0(%arg0: i32) -> (i32, i32) {
    %c0_i32 = arith.constant 0 : i32
    %c0_i32_0 = arith.constant 0 : i32
    return %arg0, %c0_i32 : i32, i32
  }
  func.func @transform_1(%arg0: i32) -> (i32, i32) {
    %c0_i32 = arith.constant 0 : i32
    %c0_i32_0 = arith.constant 0 : i32
    return %arg0, %c0_i32 : i32, i32
  }
}

</mosaic_0001>

<llo_original>
// kernel: tpu_custom_call.1
$region0: #{tpu_custom_call.1}
  #allocation0 [shape = 'u32[]', space=smem, size = 0x4, offset = 0x4, fixed_abs, tag = 'smem constant byte address 0x4 - core index']
  #allocation1 [shape = 'u32[144,128]{1,0:T(1,128)}', space=vmem, size = 0x12000, scoped, tag = 'internal scratch']
  %s0 = inlined_call_operand.hbm [shape: f32[1,512], index: 0, kind: input, shape index: {}]
  %s1 = inlined_call_operand.hbm [shape: f32[1,512], index: 1, kind: output, shape index: {}]
  %s2 = sld [smem:[#allocation0]]
  $region18: #{tpu_custom_call.1} parent=0
    _
  %s4 = ssub.s32 1, %s2
  %s5 = scalar_select 0, %s4, %s2
  $region1: #{tpu_custom_call.1} parent=0
    #allocation2 [shape = 'u8[2048]{0}', space=vmem, size = 0x800, scoped, tag = 'input window, operand 0, single buffered']
    #allocation3 [shape = 's32[1]{0}', space=sflag, size = 0x4, scoped, tag = 'scoped memory for tpu_custom_call.1']
    #allocation4 [shape = 's32[1]{0}', space=sflag, size = 0x4, scoped, tag = 'scoped memory for tpu_custom_call.1']
    #allocation5 [shape = 'u8[2048]{0}', space=vmem, size = 0x800, scoped, tag = 'output window, operand 0, single buffered']
    %6 = vsyncpa [#allocation3], 0
    %7 = vsyncpa [#allocation4], 0
    // Predicated region
    $region2: #{tpu_custom_call.1} parent=1 // pred_check
      _
    $region3: #{tpu_custom_call.1} parent=1 // pred_check_branch
      %9 = sbr.rel (0) target = $region5
    $region4: #{tpu_custom_call.1} parent=1 // pred_region
      %s11 = ssub.s32 64, 64
      %12 = vsyncadd [#allocation3], %s11
      %s14 = sshll.u32 [#allocation2], 4
      %s15 = int_to_ptr.vmem [resolvable:$true] %s14
      %17 = dma.hbm_to_vmem [thread:$0]  %s0, 64, %s15, [#allocation3]
    $region5: #{tpu_custom_call.1} parent=1 // pred_fallthru
      _
    // Predicated region
    $region6: #{tpu_custom_call.1} parent=1 // pred_check
      _
    $region7: #{tpu_custom_call.1} parent=1 // pred_check_branch
      %19 = sbr.rel (0) target = $region9
    $region8: #{tpu_custom_call.1} parent=1 // pred_region
      %20 = dma.done [#allocation3], 64
    $region9: #{tpu_custom_call.1} parent=1 // pred_fallthru
      _
    %v21 = vld [vmem:[#allocation2] sm:$0xf]
    %vm22 = vcmp.le.f32.partialorder %v21, 5.0
    %v23 = vsel %vm22, 1, 0
    %v24 = vcvt.s32.f32 %v23
    %v25 = vlaneseq
    %vm26 = vcmp.ge.s32.totalorder %v25, 0
    %vm27 = vcmp.lt.s32.totalorder %v25, 512
    %vm28 = vmand %vm26, %vm27
    %29 = vst.msk [vmem:[#allocation5] sm:$0xf] %vm28, %v24
    // Predicated region
    $region10: #{tpu_custom_call.1} parent=1 // pred_check
      _
    $region11: #{tpu_custom_call.1} parent=1 // pred_check_branch
      %31 = sbr.rel (0) target = $region13
    $region12: #{tpu_custom_call.1} parent=1 // pred_region
      %s33 = ssub.s32 64, 64
      %34 = vsyncadd [#allocation4], %s33
      %s36 = sshll.u32 [#allocation5], 4
      %s37 = int_to_ptr.vmem [resolvable:$true] %s36
      %39 = dma.vmem_to_hbm [thread:$0]  %s37, 64, %s1, [#allocation4]
    $region13: #{tpu_custom_call.1} parent=1 // pred_fallthru
      _
    // Predicated region
    $region14: #{tpu_custom_call.1} parent=1 // pred_check
      _
    $region15: #{tpu_custom_call.1} parent=1 // pred_check_branch
      %41 = sbr.rel (0) target = $region17
    $region16: #{tpu_custom_call.1} parent=1 // pred_region
      %42 = dma.done [#allocation4], 64
    $region17: #{tpu_custom_call.1} parent=1 // pred_fallthru
      _
    %43 = vsyncpa [#allocation3], 1
    %44 = vsyncpa [#allocation4], 1

</llo_original>
